<compile_context>
chip_gen: v7x
topology: tpu7x:2x2x1
jax: 0.10.0
libtpu: 0.0.40
codegen_flags: <defaults>
</compile_context>

<pallas_src>
import math

import jax
import jax.numpy as jnp
from jax.experimental import pallas as pl
from jax.experimental.pallas import tpu as pltpu

SEQUENCE_LENGTH = 14
X_DIM = 5
STATE_DIM = SEQUENCE_LENGTH * X_DIM   # 70, stand-in for len(TradingEnv().reset())

K_PAD = 128                           # padded input-feature lanes
N_PAD = 128                           # padded output lanes
BIAS_ROW = STATE_DIM                  # slab row / input column carrying the constant 1.0
Y_COL = STATE_DIM - X_DIM             # 65: y occupies output lanes [65, 70)
MAX_TB = 1024                         # batch-tile cap (~1.6 MiB double-buffered VMEM)


def _round_up(x, m):
    return (x + m - 1) // m * m


def _choose_tiling(batch):
    """Batch tile (multiple of 16) and padded batch.

    For batch >= 32, pick a tile giving >= 2 grid steps so both v7x TensorCores get
    work; otherwise a single tile covering the (tiny) batch. Tile capped at MAX_TB.
    """
    b16 = _round_up(batch, 16)
    if b16 >= 32:
        tb = min(MAX_TB, _round_up((b16 + 1) // 2, 16))
    else:
        tb = b16
    return tb, _round_up(b16, tb)


def _forward_kernel(x_ref, w_ref, out_ref):
    # x:   (TB, K_PAD)    bf16 -- rolled+augmented state tile (already bf16, no cast)
    # w:   (K_PAD, N_PAD) bf16 -- VMEM-resident weight+bias slab
    # out: (TB, N_PAD)    f32  -- lane-dense; real y at lanes [Y_COL, Y_COL+X_DIM)
    out_ref[...] = jnp.dot(x_ref[...], w_ref[...], preferred_element_type=jnp.float32)


def _next_state_kernel(x_ref, w_ref, ns_ref):
    # Fused next_state: lanes [0, 65) copy the rolled old state (x already stores the
    # state rolled left by X_DIM), lanes [65, 70) take y directly from the matmul
    # (the W slab writes y there), lanes >= 70 are zero padding.
    x = x_ref[...]
    y = jnp.dot(x, w_ref[...], preferred_element_type=jnp.float32)
    lane = jax.lax.broadcasted_iota(jnp.int32, ns_ref.shape, 1)
    ns_ref[...] = jnp.where(lane < Y_COL, x.astype(jnp.float32),
                            jnp.where(lane < STATE_DIM, y, 0.0))


def init_params(key):
    """torch.nn.Linear-style init: U(-1/sqrt(fan_in), 1/sqrt(fan_in))."""
    kw, kb = jax.random.split(key)
    bound = 1.0 / math.sqrt(STATE_DIM)
    w = jax.random.uniform(kw, (X_DIM, STATE_DIM), jnp.float32, -bound, bound)  # torch layout
    b = jax.random.uniform(kb, (X_DIM,), jnp.float32, -bound, bound)

    # One lane-padded bf16 slab holding W^T (rows permuted to match the rolled input
    # layout) plus the bias (row BIAS_ROW, paired with the constant-1 input column).
    # Output columns live at lanes [Y_COL, Y_COL+X_DIM) so the fused next_state kernel
    # needs no cross-lane moves. All padding rows/cols are exactly zero.
    perm = (jnp.arange(STATE_DIM) + X_DIM) % STATE_DIM   # slab row k <-> state feature perm[k]
    w_aug = jnp.zeros((K_PAD, N_PAD), jnp.float32)
    w_aug = w_aug.at[:STATE_DIM, Y_COL:Y_COL + X_DIM].set(w.T[perm, :])
    w_aug = w_aug.at[BIAS_ROW, Y_COL:Y_COL + X_DIM].set(b)
    return {"w": w, "b": b, "w_aug": w_aug.astype(jnp.bfloat16)}


def _build_x_aug(state, b_pad):
    """[roll(state, -X_DIM) | 1 | zeros] as a lane-padded bf16 slab (padded rows dead)."""
    batch = state.shape[0]
    rolled = jnp.concatenate([state[:, X_DIM:], state[:, :X_DIM]], axis=1)
    x_aug = jnp.zeros((b_pad, K_PAD), jnp.bfloat16)
    x_aug = x_aug.at[:batch, :STATE_DIM].set(rolled.astype(jnp.bfloat16))
    x_aug = x_aug.at[:batch, BIAS_ROW].set(1.0)
    return x_aug


def _run(kernel, x_aug, w_aug, tb):
    b_pad = x_aug.shape[0]
    bytes_accessed = x_aug.size * 2 + w_aug.size * 2 + b_pad * N_PAD * 4
    return pl.pallas_call(
        kernel,
        out_shape=jax.ShapeDtypeStruct((b_pad, N_PAD), jnp.float32),
        grid_spec=pltpu.PrefetchScalarGridSpec(
            num_scalar_prefetch=0,
            grid=(b_pad // tb,),
            in_specs=[
                pl.BlockSpec((tb, K_PAD), lambda i: (i, 0)),      # batch tiles (pipelined)
                pl.BlockSpec((K_PAD, N_PAD), lambda i: (0, 0)),   # weights VMEM-resident
            ],
            out_specs=pl.BlockSpec((tb, N_PAD), lambda i: (i, 0)),
        ),
        compiler_params=pltpu.CompilerParams(
            dimension_semantics=("parallel",)),                   # batch across v7x's 2 TCs
        cost_estimate=pl.CostEstimate(
            flops=2 * b_pad * K_PAD * N_PAD,
            transcendentals=0,
            bytes_accessed=bytes_accessed),
    )(x_aug, w_aug)


def transition_forward(state, params):
    """state: (B, STATE_DIM) f32 -> (B, X_DIM) f32  (== state @ A.weight.T + A.bias)."""
    batch = state.shape[0]
    tb, b_pad = _choose_tiling(batch)
    out = _run(_forward_kernel, _build_x_aug(state, b_pad), params["w_aug"], tb)
    return out[:batch, Y_COL:Y_COL + X_DIM]


def transition_next_state(state, params):
    """TransitionModel.next_state, fused in one pallas_call: cat(state[:, X_DIM:], y).
    The copied window is bf16-rounded once (idempotent, no cumulative drift); y is
    computed with f32 MXU accumulation and stored in f32."""
    batch = state.shape[0]
    tb, b_pad = _choose_tiling(batch)
    ns = _run(_next_state_kernel, _build_x_aug(state, b_pad), params["w_aug"], tb)
    return ns[:batch, :STATE_DIM]


if __name__ == "__main__":
    key = jax.random.PRNGKey(0)
    k_params, k_state = jax.random.split(key)

    B = 2
    params = init_params(k_params)
    state = jax.random.normal(k_state, (B, STATE_DIM), jnp.float32)

    y = jax.block_until_ready(transition_forward(state, params))
    assert y.shape == (B, X_DIM)

    # bf16-consistent reference (same operand quantization as the kernel)
    ref_bf = (jnp.dot(state.astype(jnp.bfloat16), params["w"].T.astype(jnp.bfloat16),
                      preferred_element_type=jnp.float32)
              + params["b"].astype(jnp.bfloat16).astype(jnp.float32))
    ref_f32 = state @ params["w"].T + params["b"]
    assert jnp.allclose(y, ref_bf, atol=5e-3, rtol=5e-3), "mismatch vs bf16 reference"
    assert jnp.allclose(y, ref_f32, atol=5e-2, rtol=5e-2), "mismatch vs fp32 reference"

    # fused next_state: copied window == bf16-rounded state, appended columns == y
    ns = jax.block_until_ready(transition_next_state(state, params))
    assert ns.shape == (B, STATE_DIM)
    assert jnp.allclose(ns[:, :Y_COL],
                        state[:, X_DIM:].astype(jnp.bfloat16).astype(jnp.float32),
                        atol=1e-6, rtol=0.0), "next_state rolled-window mismatch"
    assert jnp.allclose(ns[:, Y_COL:], y, atol=1e-5, rtol=1e-5), "next_state y mismatch"

    # multi-step grid smoke test (exercises the >=2-step tiling path)
    B2 = 300
    state2 = jax.random.normal(jax.random.PRNGKey(1), (B2, STATE_DIM), jnp.float32)
    y2 = jax.block_until_ready(transition_forward(state2, params))
    ref2 = state2 @ params["w"].T + params["b"]
    assert y2.shape == (B2, X_DIM)
    assert jnp.allclose(y2, ref2, atol=5e-2, rtol=5e-2), "large-batch mismatch vs fp32 ref"

    print("KERNEL_OK")
</pallas_src>

<mosaic_0001>
module attributes {stable_mosaic.version = 11 : i64} {
  func.func @_forward_kernel(%arg0: i32, %arg1: memref<16x128xbf16, #tpu.memory_space<vmem>>, %arg2: memref<128x128xbf16, #tpu.memory_space<vmem>>, %arg3: memref<16x128xf32, #tpu.memory_space<vmem>>) attributes {dimension_semantics = [#tpu.dimension_semantics<parallel>], iteration_bounds = array<i64: 1>, scalar_prefetch = 0 : i64, scratch_operands = 0 : i64, tpu.core_type = #tpu.core_type<tc>, window_params = [{transform_indices = @transform_0, window_bounds = array<i64: 16, 128>}, {pipeline_mode = #tpu.pipeline_mode<synchronous>, transform_indices = @transform_1, window_bounds = array<i64: 128, 128>}, {transform_indices = @transform_2, window_bounds = array<i64: 16, 128>}]} {
    %c0 = arith.constant 0 : index
    %c0_0 = arith.constant 0 : index
    %0 = vector.load %arg1[%c0, %c0_0] : memref<16x128xbf16, #tpu.memory_space<vmem>>, vector<16x128xbf16>
    %c0_1 = arith.constant 0 : index
    %c0_2 = arith.constant 0 : index
    %1 = vector.load %arg2[%c0_1, %c0_2] : memref<128x128xbf16, #tpu.memory_space<vmem>>, vector<128x128xbf16>
    %cst = arith.constant dense<0.000000e+00> : vector<16x128xf32>
    %2 = tpu.matmul %0, %1, %cst {dimension_numbers = #tpu.dot_dimension_numbers<[1], [0], [0], [1], [0, 0, 1, 1], [], []>} : vector<16x128xbf16>, vector<128x128xbf16>, vector<16x128xf32> -> vector<16x128xf32>
    %c0_3 = arith.constant 0 : index
    %c0_4 = arith.constant 0 : index
    %3 = vector.load %arg3[%c0_3, %c0_4] : memref<16x128xf32, #tpu.memory_space<vmem>>, vector<16x128xf32>
    tpu.vector_store %arg3[%c0_3, %c0_4], %2 {strides = array<i32>} : memref<16x128xf32, #tpu.memory_space<vmem>>, vector<16x128xf32>,
    return
  }
  func.func @transform_0(%arg0: i32) -> (i32, i32) {
    %c0_i32 = arith.constant 0 : i32
    %c0_i32_0 = arith.constant 0 : i32
    return %arg0, %c0_i32 : i32, i32
  }
  func.func @transform_1(%arg0: i32) -> (i32, i32) {
    %c0_i32 = arith.constant 0 : i32
    %c0_i32_0 = arith.constant 0 : i32
    %c0_i32_1 = arith.constant 0 : i32
    return %c0_i32, %c0_i32_0 : i32, i32
  }
  func.func @transform_2(%arg0: i32) -> (i32, i32) {
    %c0_i32 = arith.constant 0 : i32
    %c0_i32_0 = arith.constant 0 : i32
    return %arg0, %c0_i32 : i32, i32
  }
}

</mosaic_0001>

<llo_original>
// kernel: tpu_custom_call.1
$region0: #{tpu_custom_call.1}
  #allocation0 [shape = 'u32[]', space=smem, size = 0x4, offset = 0x4, fixed_abs, tag = 'smem constant byte address 0x4 - core index']
  #allocation1 [shape = 'u32[144,128]{1,0:T(1,128)}', space=vmem, size = 0x12000, scoped, tag = 'internal scratch']
  %s0 = inlined_call_operand.hbm [shape: bf16[16,128], index: 0, kind: input, shape index: {}]
  %s1 = inlined_call_operand.hbm [shape: bf16[128,128], index: 1, kind: input, shape index: {}]
  %s2 = inlined_call_operand.hbm [shape: f32[16,128], index: 2, kind: output, shape index: {}]
  %s3 = sld [smem:[#allocation0]]
  $region26: #{tpu_custom_call.1} parent=0
    _
  %s5 = ssub.s32 1, %s3
  %s6 = scalar_select 0, %s5, %s3
  $region1: #{tpu_custom_call.1} parent=0
    #allocation2 [shape = 'u8[4096]{0}', space=vmem, size = 0x1000, scoped, tag = 'input window, operand 0, single buffered']
    #allocation3 [shape = 's32[1]{0}', space=sflag, size = 0x4, scoped, tag = 'scoped memory for tpu_custom_call.1']
    #allocation4 [shape = 's32[1]{0}', space=sflag, size = 0x4, scoped, tag = 'scoped memory for tpu_custom_call.1']
    #allocation5 [shape = 'u8[32768]{0}', space=vmem, size = 0x8000, scoped, tag = 'input window, operand 1, single buffered']
    #allocation6 [shape = 's32[1]{0}', space=sflag, size = 0x4, scoped, tag = 'scoped memory for tpu_custom_call.1']
    #allocation7 [shape = 'u8[8192]{0}', space=vmem, size = 0x2000, scoped, tag = 'output window, operand 0, single buffered']
    %7 = vsyncpa [#allocation3], 0
    %8 = vsyncpa [#allocation6], 0
    %9 = vsyncpa [#allocation4], 0
    // Predicated region
    $region2: #{tpu_custom_call.1} parent=1 // pred_check
      _
    $region3: #{tpu_custom_call.1} parent=1 // pred_check_branch
      %11 = sbr.rel (0) target = $region5
    $region4: #{tpu_custom_call.1} parent=1 // pred_region
      %s13 = ssub.s32 128, 128
      %14 = vsyncadd [#allocation3], %s13
      %s15 = sshll.u32 [#allocation2], 4
      %s16 = int_to_ptr.vmem [resolvable:$true] %s15
      %21 = dma.hbm_to_vmem [thread:$0]  %s0, 128, %s16, [#allocation3], 64, 64, 4
    $region5: #{tpu_custom_call.1} parent=1 // pred_fallthru
      _
    // Predicated region
    $region6: #{tpu_custom_call.1} parent=1 // pred_check
      _
    $region7: #{tpu_custom_call.1} parent=1 // pred_check_branch
      %23 = sbr.rel (0) target = $region9
    $region8: #{tpu_custom_call.1} parent=1 // pred_region
      %s25 = ssub.s32 1024, 1024
      %26 = vsyncadd [#allocation6], %s25
      %s27 = sshll.u32 [#allocation5], 4
      %s28 = int_to_ptr.vmem [resolvable:$true] %s27
      %33 = dma.hbm_to_vmem [thread:$0]  %s1, 1024, %s28, [#allocation6], 64, 64, 4
    $region9: #{tpu_custom_call.1} parent=1 // pred_fallthru
      _
    // Predicated region
    $region10: #{tpu_custom_call.1} parent=1 // pred_check
      _
    $region11: #{tpu_custom_call.1} parent=1 // pred_check_branch
      %35 = sbr.rel (0) target = $region13
    $region12: #{tpu_custom_call.1} parent=1 // pred_region
      %36 = dma.done [#allocation3], 128
    $region13: #{tpu_custom_call.1} parent=1 // pred_fallthru
      _
    // Predicated region
    $region14: #{tpu_custom_call.1} parent=1 // pred_check
      _
    $region15: #{tpu_custom_call.1} parent=1 // pred_check_branch
      %38 = sbr.rel (0) target = $region17
    $region16: #{tpu_custom_call.1} parent=1 // pred_region
      %39 = dma.done [#allocation6], 1024
    $region17: #{tpu_custom_call.1} parent=1 // pred_fallthru
      _
    %v41 = vld [vmem:[#allocation2] sm:$0xf]
    %v42 = vld [vmem:[#allocation2 + $0x4] sm:$0xf]
    %v43 = vld [vmem:[#allocation5] sm:$0xf]
    %v44 = vld [vmem:[#allocation5 + $0x4] sm:$0xf]
    %v45 = vld [vmem:[#allocation5 + $0x8] sm:$0xf]
    %v46 = vld [vmem:[#allocation5 + $0xc] sm:$0xf]
    %v47 = vld [vmem:[#allocation5 + $0x10] sm:$0xf]
    %v48 = vld [vmem:[#allocation5 + $0x14] sm:$0xf]
    %v49 = vld [vmem:[#allocation5 + $0x18] sm:$0xf]
    %v50 = vld [vmem:[#allocation5 + $0x1c] sm:$0xf]
    %v51 = vld [vmem:[#allocation5 + $0x20] sm:$0xf]
    %v52 = vld [vmem:[#allocation5 + $0x24] sm:$0xf]
    %v53 = vld [vmem:[#allocation5 + $0x28] sm:$0xf]
    %v54 = vld [vmem:[#allocation5 + $0x2c] sm:$0xf]
    %v55 = vld [vmem:[#allocation5 + $0x30] sm:$0xf]
    %v56 = vld [vmem:[#allocation5 + $0x34] sm:$0xf]
    %v57 = vld [vmem:[#allocation5 + $0x38] sm:$0xf]
    %v58 = vld [vmem:[#allocation5 + $0x3c] sm:$0xf]
    %v61 = vunpack.c.l.b16 %v41
    %v62 = vunpack.c.l.b16 %v42
    %v63 = vpack.c.b16 %v62, %v61
    %v81 = vunpack.c.l.b16 %v43
    %v82 = vunpack.c.l.b16 %v44
    %v83 = vunpack.c.l.b16 %v45
    %v84 = vunpack.c.l.b16 %v46
    %v85 = vunpack.c.l.b16 %v47
    %v86 = vunpack.c.l.b16 %v48
    %v87 = vunpack.c.l.b16 %v49
    %v88 = vunpack.c.l.b16 %v50
    %v89 = vunpack.c.l.b16 %v51
    %v90 = vunpack.c.l.b16 %v52
    %v91 = vunpack.c.l.b16 %v53
    %v92 = vunpack.c.l.b16 %v54
    %v93 = vunpack.c.l.b16 %v55
    %v94 = vunpack.c.l.b16 %v56
    %v95 = vunpack.c.l.b16 %v57
    %v96 = vunpack.c.l.b16 %v58
    %v97 = vpack.c.b16 %v82, %v81
    %v98 = vpack.c.b16 %v84, %v83
    %v99 = vpack.c.b16 %v86, %v85
    %v100 = vpack.c.b16 %v88, %v87
    %v101 = vpack.c.b16 %v90, %v89
    %v102 = vpack.c.b16 %v92, %v91
    %v103 = vpack.c.b16 %v94, %v93
    %v104 = vpack.c.b16 %v96, %v95
    %113 = vmatprep.subr.bf16.mxu0 0
    %114 = vmatpush1.bf16.msra.mxu0 %v97
    %115 = vmatprep.subr.bf16.mxu0 0
    %116 = vmatpush1.bf16.msra.mxu0 %v98
    %117 = vmatprep.subr.bf16.mxu0 0
    %118 = vmatpush1.bf16.msra.mxu0 %v99
    %119 = vmatprep.subr.bf16.mxu0 0
    %120 = vmatpush1.bf16.msra.mxu0 %v100
    %121 = vmatprep.subr.bf16.mxu0 0
    %122 = vmatpush1.bf16.msra.mxu0 %v101
    %123 = vmatprep.subr.bf16.mxu0 0
    %124 = vmatpush1.bf16.msra.mxu0 %v102
    %125 = vmatprep.subr.bf16.mxu0 0
    %126 = vmatpush1.bf16.msra.mxu0 %v103
    %127 = vmatprep.subr.bf16.mxu0 0
    %128 = vmatpush1.bf16.msra.mxu0 %v104
    %129 = vmatprep.subr.bf16.mxu0 0
    %130 = vmatpush1.bf16.msra.mxu0 0
    %131 = vmatprep.subr.bf16.mxu0 0
    %132 = vmatpush1.bf16.msra.mxu0 0
    %133 = vmatprep.subr.bf16.mxu0 0
    %134 = vmatpush1.bf16.msra.mxu0 0
    %135 = vmatprep.subr.bf16.mxu0 0
    %136 = vmatpush1.bf16.msra.mxu0 0
    %137 = vmatprep.subr.bf16.mxu0 0
    %138 = vmatpush1.bf16.msra.mxu0 0
    %139 = vmatprep.subr.bf16.mxu0 0
    %140 = vmatpush1.bf16.msra.mxu0 0
    %141 = vmatprep.subr.bf16.mxu0 0
    %142 = vmatpush1.bf16.msra.mxu0 0
    %143 = vmatprep.subr.bf16.mxu0 0
    %144 = vmatpush1.bf16.msra.mxu0 0
    %145 = vmatprep.mubr.bf16.mxu0 0
    %146 = vmatmul.mubr.bf16.gmra.mrb[0].mxu0 %v63
    %v147 = vpop.f32.mrb[0].mxu0
    %v148 = vadd.f32 0.0, %v147
    %v149 = vpop.f32.mrb[0].mxu0
    %v150 = vpop.f32.mrb[0].mxu0
    %v151 = vadd.f32 0.0, %v150
    %v152 = vpop.f32.mrb[0].mxu0
    %153 = vdwg.mxu0
    %154 = vst [vmem:[#allocation7] sm:$0xff] %v148
    %155 = vst [vmem:[#allocation7 + $0x8] sm:$0xff] %v151
    // Predicated region
    $region18: #{tpu_custom_call.1} parent=1 // pred_check
      _
    $region19: #{tpu_custom_call.1} parent=1 // pred_check_branch
      %157 = sbr.rel (0) target = $region21
    $region20: #{tpu_custom_call.1} parent=1 // pred_region
      %s159 = ssub.s32 256, 256
      %160 = vsyncadd [#allocation4], %s159
      %s161 = sshll.u32 [#allocation7], 4
      %s162 = int_to_ptr.vmem [resolvable:$true] %s161
      %167 = dma.vmem_to_hbm [thread:$0]  %s162, 256, %s2, [#allocation4], 128, 128, 8
    $region21: #{tpu_custom_call.1} parent=1 // pred_fallthru
      _
    // Predicated region
    $region22: #{tpu_custom_call.1} parent=1 // pred_check
      _
    $region23: #{tpu_custom_call.1} parent=1 // pred_check_branch
      %169 = sbr.rel (0) target = $region25
    $region24: #{tpu_custom_call.1} parent=1 // pred_region
      %170 = dma.done [#allocation4], 256
    $region25: #{tpu_custom_call.1} parent=1 // pred_fallthru
      _
    %171 = vsyncpa [#allocation3], 1
    %172 = vsyncpa [#allocation6], 1
    %173 = vsyncpa [#allocation4], 1

</llo_original>
